<compile_context>
chip_gen: v7x
topology: tpu7x:2x2x1
jax: 0.10.0
libtpu: 0.0.40
codegen_flags: <defaults>
</compile_context>

<pallas_src>
import numpy as np
import jax
import jax.numpy as jnp
from jax.experimental import pallas as pl
from jax.experimental.pallas import tpu as pltpu

# ----- problem sizes implied by the module -----
N = 8            # batch (small; sublane-aligned)
F_IN = 8         # BatchNorm1d(num_features=8) / Linear in-features
F_H = 4          # Linear(8, 4)
F_OUT = 1        # Linear(4, 1)
EPS = 1e-5       # PyTorch BatchNorm default eps
ALPHA_LO = -0.3  # bound_alpha
ALPHA_HI = 0.3

# Packed-parameter slab layout, shape (8, 16) f32 (one vreg after padding):
#   [:,  0: 4]  -> w1_eff (8, 4)   LN1 weight with BN gamma folded in
#   [0:1, 4: 8] -> b1_eff (1, 4)   LN1 bias with BN beta folded in
#   [0:1, 8:12] -> w2 row (1, 4)   block_alpha Linear(4,1) weight
#   [0:1,12:13] -> b2     (1, 1)   block_alpha Linear(4,1) bias
SLAB_ROWS = 8
SLAB_COLS = 16


def mlp_gt3_2_kernel(x_ref, p_ref, out_ref):
    x = x_ref[...]                                   # (N, 8) f32
    n_inv = 1.0 / x.shape[0]

    # ---- BN1: train-mode batch statistics per feature over N.
    #      (gamma/beta already folded into w1_eff/b1_eff in the slab)
    mu = jnp.sum(x, axis=0, keepdims=True) * n_inv            # (1, 8)
    d = x - mu
    var = jnp.sum(d * d, axis=0, keepdims=True) * n_inv       # (1, 8)
    xh = d * jax.lax.rsqrt(var + EPS)                         # (N, 8)

    # Static slices into the packed parameter slab (zero runtime cost).
    w1 = p_ref[0:SLAB_ROWS, 0:F_H]                            # (8, 4)
    b1 = p_ref[0:1, F_H:2 * F_H]                              # (1, 4)
    w2 = p_ref[0:1, 2 * F_H:3 * F_H]                          # (1, 4)
    b2 = p_ref[0:1, 3 * F_H:3 * F_H + 1]                      # (1, 1)

    # ---- LN1: Linear(8 -> 4) + ReLU (single MXU matmul, f32 acc) ----
    h = jnp.dot(xh, w1, preferred_element_type=jnp.float32)
    h = jnp.maximum(h + b1, 0.0)                              # (N, 4)

    # ---- block_alpha: Linear(4 -> 1) on the VPU/XLU (no second MXU trip),
    #      then Tanh + clamp ----
    a = jnp.sum(h * w2, axis=-1, keepdims=True) + b2          # (N, 1)
    out_ref[...] = jnp.clip(jnp.tanh(a), ALPHA_LO, ALPHA_HI)


def prepare_params(params):
    """One-time parameter packing (call at parameter-setup time, NOT per step).

    Folds BN1's affine into LN1 (BN post-normalization is linear):
      Linear(gamma * xhat + beta) = (gamma ⊙ rows of W1) @ xhat + (b1 + beta @ W1)
    and packs all weights/biases into a single (8, 16) f32 slab.
    """
    w1_eff = params["w1"] * params["bn1_g"][:, None]             # (8, 4)
    b1_eff = params["b1"] + params["bn1_b"] @ params["w1"]       # (4,)
    slab = jnp.zeros((SLAB_ROWS, SLAB_COLS), jnp.float32)
    slab = slab.at[:, 0:F_H].set(w1_eff)
    slab = slab.at[0, F_H:2 * F_H].set(b1_eff)
    slab = slab.at[0, 2 * F_H:3 * F_H].set(params["w2"][:, 0])
    slab = slab.at[0, 3 * F_H].set(params["b2"][0])
    return slab


@jax.jit
def mlp_gt3_2_forward(x, slab):
    """Forward pass: exactly one pallas_call (squeeze fuses to metadata under jit)."""
    n = x.shape[0]
    x2 = x.reshape(n, F_IN).astype(jnp.float32)   # torch.squeeze(x, dim=1)

    vmem = pl.BlockSpec(memory_space=pltpu.MemorySpace.VMEM)
    cost = pl.CostEstimate(
        flops=2 * n * F_IN * F_H + 2 * n * F_H * F_OUT + 8 * n * F_IN,
        transcendentals=n * F_OUT,                               # tanh
        bytes_accessed=4 * (n * F_IN + SLAB_ROWS * SLAB_COLS + n * F_OUT),
    )
    return pl.pallas_call(
        mlp_gt3_2_kernel,
        out_shape=jax.ShapeDtypeStruct((n, F_OUT), jnp.float32),
        in_specs=[vmem, vmem],
        out_specs=vmem,
        cost_estimate=cost,
    )(x2, slab)


def reference_forward(x, params):
    """Pure-JAX reference with identical math (sanity check)."""
    x2 = x.reshape(x.shape[0], x.shape[-1]).astype(jnp.float32)
    mu = jnp.mean(x2, axis=0, keepdims=True)
    var = jnp.mean((x2 - mu) ** 2, axis=0, keepdims=True)
    xh = (x2 - mu) * jax.lax.rsqrt(var + EPS)
    xh = xh * params["bn1_g"][None, :] + params["bn1_b"][None, :]
    h = jnp.maximum(xh @ params["w1"] + params["b1"], 0.0)
    a = jnp.tanh(h @ params["w2"] + params["b2"])
    return jnp.clip(a, ALPHA_LO, ALPHA_HI)


def make_params(key, random_bn_affine=False):
    """PyTorch-default init; optionally random BN affine to exercise folding."""
    ks = jax.random.split(key, 6)
    bound1 = 1.0 / np.sqrt(F_IN)
    w1 = jax.random.uniform(ks[0], (F_IN, F_H), jnp.float32, -bound1, bound1)
    b1 = jax.random.uniform(ks[1], (F_H,), jnp.float32, -bound1, bound1)
    bound2 = 1.0 / np.sqrt(F_H)
    w2 = jax.random.uniform(ks[2], (F_H, F_OUT), jnp.float32, -bound2, bound2)
    b2 = jax.random.uniform(ks[3], (F_OUT,), jnp.float32, -bound2, bound2)
    if random_bn_affine:
        bn_g = 1.0 + 0.25 * jax.random.normal(ks[4], (F_IN,), jnp.float32)
        bn_b = 0.1 * jax.random.normal(ks[5], (F_IN,), jnp.float32)
    else:
        bn_g = jnp.ones((F_IN,), jnp.float32)    # PyTorch BN affine defaults
        bn_b = jnp.zeros((F_IN,), jnp.float32)
    return {"bn1_g": bn_g, "bn1_b": bn_b, "w1": w1, "b1": b1, "w2": w2, "b2": b2}


if __name__ == "__main__":
    key = jax.random.PRNGKey(0)
    kx, kp1, kp2 = jax.random.split(key, 3)
    x = jax.random.normal(kx, (N, 1, F_IN), jnp.float32)   # (N, 1, 8) as in torch

    ok = True
    for tag, params in (
        ("default_affine", make_params(kp1, random_bn_affine=False)),
        ("random_affine", make_params(kp2, random_bn_affine=True)),
    ):
        slab = prepare_params(params)            # one-time packing (setup time)
        alpha = mlp_gt3_2_forward(x, slab)
        jax.block_until_ready(alpha)

        r_alpha = np.asarray(reference_forward(x, params))
        a_np = np.asarray(alpha)
        assert a_np.shape == (N, F_OUT), tag
        assert np.all(np.isfinite(a_np)), tag
        assert np.all(a_np >= ALPHA_LO - 1e-6) and np.all(a_np <= ALPHA_HI + 1e-6), tag
        ok &= np.allclose(a_np, r_alpha, rtol=1e-3, atol=1e-4)

    assert ok
    print("KERNEL_OK")
</pallas_src>

<mosaic_0001>
module attributes {stable_mosaic.version = 11 : i64} {
  func.func @mlp_gt3_2_kernel(%arg0: memref<8x8xf32, #tpu.memory_space<vmem>>, %arg1: memref<8x16xf32, #tpu.memory_space<vmem>>, %arg2: memref<8x1xf32, #tpu.memory_space<vmem>>) attributes {dimension_semantics = [], scalar_prefetch = 0 : i64, scratch_operands = 0 : i64, tpu.core_type = #tpu.core_type<tc>} {
    %c0 = arith.constant 0 : index
    %c0_0 = arith.constant 0 : index
    %0 = vector.load %arg0[%c0, %c0_0] : memref<8x8xf32, #tpu.memory_space<vmem>>, vector<8x8xf32>
    %cst = arith.constant dense<0.000000e+00> : vector<8xf32>
    %1 = vector.multi_reduction <add>, %0, %cst [0] : vector<8x8xf32> to vector<8xf32>
    %2 = vector.shape_cast %1 : vector<8xf32> to vector<1x8xf32>
    %cst_1 = arith.constant 1.250000e-01 : f32
    %3 = vector.broadcast %cst_1 : f32 to vector<1x8xf32>
    %4 = arith.mulf %2, %3 : vector<1x8xf32>
    %5 = vector.broadcast %4 : vector<1x8xf32> to vector<8x8xf32>
    %6 = arith.subf %0, %5 : vector<8x8xf32>
    %7 = arith.mulf %6, %6 : vector<8x8xf32>
    %cst_2 = arith.constant dense<0.000000e+00> : vector<8xf32>
    %8 = vector.multi_reduction <add>, %7, %cst_2 [0] : vector<8x8xf32> to vector<8xf32>
    %9 = vector.shape_cast %8 : vector<8xf32> to vector<1x8xf32>
    %cst_3 = arith.constant 1.250000e-01 : f32
    %10 = vector.broadcast %cst_3 : f32 to vector<1x8xf32>
    %11 = arith.mulf %9, %10 : vector<1x8xf32>
    %cst_4 = arith.constant 9.99999974E-6 : f32
    %12 = vector.broadcast %cst_4 : f32 to vector<1x8xf32>
    %13 = arith.addf %11, %12 : vector<1x8xf32>
    %14 = math.rsqrt %13 : vector<1x8xf32>
    %15 = vector.broadcast %14 : vector<1x8xf32> to vector<8x8xf32>
    %16 = arith.mulf %6, %15 : vector<8x8xf32>
    %c0_5 = arith.constant 0 : index
    %c0_6 = arith.constant 0 : index
    %17 = vector.load %arg1[%c0_5, %c0_6] : memref<8x16xf32, #tpu.memory_space<vmem>>, vector<8x4xf32>
    %c0_7 = arith.constant 0 : index
    %c4 = arith.constant 4 : index
    %18 = vector.load %arg1[%c0_7, %c4] : memref<8x16xf32, #tpu.memory_space<vmem>>, vector<1x4xf32>
    %c0_8 = arith.constant 0 : index
    %c8 = arith.constant 8 : index
    %19 = vector.load %arg1[%c0_8, %c8] : memref<8x16xf32, #tpu.memory_space<vmem>>, vector<1x4xf32>
    %c0_9 = arith.constant 0 : index
    %c12 = arith.constant 12 : index
    %20 = vector.load %arg1[%c0_9, %c12] : memref<8x16xf32, #tpu.memory_space<vmem>>, vector<1x1xf32>
    %cst_10 = arith.constant dense<0.000000e+00> : vector<8x4xf32>
    %21 = tpu.matmul %16, %17, %cst_10 {dimension_numbers = #tpu.dot_dimension_numbers<[1], [0], [0], [1], [0, 0, 1, 1], [], []>} : vector<8x8xf32>, vector<8x4xf32>, vector<8x4xf32> -> vector<8x4xf32>
    %22 = vector.broadcast %18 : vector<1x4xf32> to vector<8x4xf32>
    %23 = arith.addf %21, %22 : vector<8x4xf32>
    %cst_11 = arith.constant 0.000000e+00 : f32
    %24 = vector.broadcast %cst_11 : f32 to vector<8x4xf32>
    %25 = arith.maximumf %23, %24 : vector<8x4xf32>
    %26 = vector.broadcast %19 : vector<1x4xf32> to vector<8x4xf32>
    %27 = arith.mulf %25, %26 : vector<8x4xf32>
    %cst_12 = arith.constant dense<0.000000e+00> : vector<8xf32>
    %28 = vector.multi_reduction <add>, %27, %cst_12 [1] : vector<8x4xf32> to vector<8xf32>
    %29 = vector.shape_cast %28 : vector<8xf32> to vector<8x1xf32>
    %30 = vector.broadcast %20 : vector<1x1xf32> to vector<8x1xf32>
    %31 = arith.addf %29, %30 : vector<8x1xf32>
    %32 = math.tanh %31 : vector<8x1xf32>
    %cst_13 = arith.constant -3.000000e-01 : f32
    %cst_14 = arith.constant 3.000000e-01 : f32
    %33 = vector.broadcast %cst_13 : f32 to vector<8x1xf32>
    %34 = arith.maximumf %33, %32 : vector<8x1xf32>
    %35 = vector.broadcast %cst_14 : f32 to vector<8x1xf32>
    %36 = arith.minimumf %35, %34 : vector<8x1xf32>
    %c0_15 = arith.constant 0 : index
    %c0_16 = arith.constant 0 : index
    %37 = vector.load %arg2[%c0_15, %c0_16] : memref<8x1xf32, #tpu.memory_space<vmem>>, vector<8x1xf32>
    tpu.vector_store %arg2[%c0_15, %c0_16], %36 {strides = array<i32>} : memref<8x1xf32, #tpu.memory_space<vmem>>, vector<8x1xf32>,
    return
  }
}

</mosaic_0001>

<llo_original>
// kernel: mlp_gt3_2_forward.1
$region0: #{mlp_gt3_2_forward.1}
  #allocation0 [shape = 'u32[]', space=smem, size = 0x4, offset = 0x4, fixed_abs, tag = 'smem constant byte address 0x4 - core index']
  #allocation1 [shape = 'u32[144,128]{1,0:T(1,128)}', space=vmem, size = 0x12000, scoped, tag = 'internal scratch']
  %s0 = inlined_call_operand.hbm [shape: f32[8,8], index: 0, kind: input, shape index: {}]
  %s1 = inlined_call_operand.hbm [shape: f32[8,16], index: 1, kind: input, shape index: {}]
  %s2 = inlined_call_operand.vmem [shape: f32[8,1], index: 2, kind: output, shape index: {}]
  %s3 = sld [smem:[#allocation0]]
  $region26: #{mlp_gt3_2_forward.1} parent=0
    _
  %s5 = ssub.s32 1, %s3
  %s6 = scalar_select 0, %s5, %s3
  $region1: #{mlp_gt3_2_forward.1} parent=0
    #allocation2 [shape = 'u8[4096]{0}', space=vmem, size = 0x1000, scoped, tag = 'input window, operand 0, single buffered']
    #allocation3 [shape = 's32[1]{0}', space=sflag, size = 0x4, scoped, tag = 'scoped memory for mlp_gt3_2_forward.1']
    #allocation4 [shape = 'u8[4096]{0}', space=vmem, size = 0x1000, scoped, tag = 'input window, operand 1, single buffered']
    #allocation5 [shape = 's32[1]{0}', space=sflag, size = 0x4, scoped, tag = 'scoped memory for mlp_gt3_2_forward.1']
    %7 = vsyncpa [#allocation3], 0
    %8 = vsyncpa [#allocation5], 0
    // Predicated region
    $region2: #{mlp_gt3_2_forward.1} parent=1 // pred_check
      _
    $region3: #{mlp_gt3_2_forward.1} parent=1 // pred_check_branch
      %10 = sbr.rel (0) target = $region5
    $region4: #{mlp_gt3_2_forward.1} parent=1 // pred_region
      %s12 = ssub.s32 128, 128
      %13 = vsyncadd [#allocation3], %s12
      %s15 = sshll.u32 [#allocation2], 4
      %s16 = int_to_ptr.vmem [resolvable:$true] %s15
      %18 = dma.hbm_to_vmem [thread:$0]  %s0, 128, %s16, [#allocation3]
    $region5: #{mlp_gt3_2_forward.1} parent=1 // pred_fallthru
      _
    // Predicated region
    $region6: #{mlp_gt3_2_forward.1} parent=1 // pred_check
      _
    $region7: #{mlp_gt3_2_forward.1} parent=1 // pred_check_branch
      %20 = sbr.rel (0) target = $region9
    $region8: #{mlp_gt3_2_forward.1} parent=1 // pred_region
      %s22 = ssub.s32 128, 128
      %23 = vsyncadd [#allocation5], %s22
      %s25 = sshll.u32 [#allocation4], 4
      %s26 = int_to_ptr.vmem [resolvable:$true] %s25
      %28 = dma.hbm_to_vmem [thread:$0]  %s1, 128, %s26, [#allocation5]
    $region9: #{mlp_gt3_2_forward.1} parent=1 // pred_fallthru
      _
    // Predicated region
    $region10: #{mlp_gt3_2_forward.1} parent=1 // pred_check
      _
    $region11: #{mlp_gt3_2_forward.1} parent=1 // pred_check_branch
      %30 = sbr.rel (0) target = $region13
    $region12: #{mlp_gt3_2_forward.1} parent=1 // pred_region
      %31 = dma.done [#allocation3], 128
    $region13: #{mlp_gt3_2_forward.1} parent=1 // pred_fallthru
      _
    // Predicated region
    $region14: #{mlp_gt3_2_forward.1} parent=1 // pred_check
      _
    $region15: #{mlp_gt3_2_forward.1} parent=1 // pred_check_branch
      %33 = sbr.rel (0) target = $region17
    $region16: #{mlp_gt3_2_forward.1} parent=1 // pred_region
      %34 = dma.done [#allocation5], 128
    $region17: #{mlp_gt3_2_forward.1} parent=1 // pred_fallthru
      _
    %v35 = vld [vmem:[#allocation2] sm:$0xff]
    %vm36 = vcmask 64512
    %v37 = vsel %vm36, %v35, 0.0
    %v38 = vrot.slane %v37, 4
    %v39 = vadd.f32 %v37, %v38
    %v40 = vrot.slane %v39, 2
    %v41 = vadd.f32 %v39, %v40
    %v42 = vrot.slane %v41, 1
    %v43 = vadd.f32 %v41, %v42
    %v44 = vmul.f32 %v43, 0.125
    %v45 = vsub.f32 %v35, %v44
    %v46 = vmul.f32 %v45, %v45
    %v47 = vsel %vm36, %v46, 0.0
    %v48 = vrot.slane %v47, 4
    %v49 = vadd.f32 %v47, %v48
    %v50 = vrot.slane %v49, 2
    %v51 = vadd.f32 %v49, %v50
    %v52 = vrot.slane %v51, 1
    %v53 = vadd.f32 %v51, %v52
    %v54 = vmul.f32 %v53, 0.125
    %v55 = vadd.f32 %v54, 1e-05
    %v56 = vrsqrt.pop %v55
    %v57 = vmul.f32 %v45, %v56
    %v58 = vld [vmem:[#allocation4] sm:$0xff]
    %v59 = vld [vmem:[#allocation4] sm:$0x1]
    %v60 = vlaneseq
    %v61 = vshrl.u32 %v60, 7
    %v62 = vsub.s32 0, %v61
    %v63 = vrot.slane %v59, %v62
    %65 = vrot.lane.b32.xlu0 %v63, 124
    %v66 = vpop.permute.xlu0 %65
    %v69 = vsel %vm36, %v57, 0
    %71 = vmatprep.subr.mxu0 0.0
    %72 = vmatpush1.msra.mxu0 %v58
    %73 = vmatprep.subr.mxu0 0.0
    %74 = vmatpush1.msra.mxu0 0.0
    %75 = vmatprep.subr.mxu0 0.0
    %76 = vmatpush1.msra.mxu0 0.0
    %77 = vmatprep.subr.mxu0 0.0
    %78 = vmatpush1.msra.mxu0 0.0
    %79 = vmatprep.subr.mxu0 0.0
    %80 = vmatpush1.msra.mxu0 0.0
    %81 = vmatprep.subr.mxu0 0.0
    %82 = vmatpush1.msra.mxu0 0.0
    %83 = vmatprep.subr.mxu0 0.0
    %84 = vmatpush1.msra.mxu0 0.0
    %85 = vmatprep.subr.mxu0 0.0
    %86 = vmatpush1.msra.mxu0 0.0
    %87 = vmatprep.subr.mxu0 0.0
    %88 = vmatpush1.msra.mxu0 0.0
    %89 = vmatprep.subr.mxu0 0.0
    %90 = vmatpush1.msra.mxu0 0.0
    %91 = vmatprep.subr.mxu0 0.0
    %92 = vmatpush1.msra.mxu0 0.0
    %93 = vmatprep.subr.mxu0 0.0
    %94 = vmatpush1.msra.mxu0 0.0
    %95 = vmatprep.subr.mxu0 0.0
    %96 = vmatpush1.msra.mxu0 0.0
    %97 = vmatprep.subr.mxu0 0.0
    %98 = vmatpush1.msra.mxu0 0.0
    %99 = vmatprep.subr.mxu0 0.0
    %100 = vmatpush1.msra.mxu0 0.0
    %101 = vmatprep.subr.mxu0 0.0
    %102 = vmatpush1.msra.mxu0 0.0
    %103 = vmatprep.subr.mxu0 0.0
    %104 = vmatpush1.msra.mxu0 0.0
    %105 = vmatprep.subr.mxu0 0.0
    %106 = vmatpush1.msra.mxu0 0.0
    %107 = vmatprep.subr.mxu0 0.0
    %108 = vmatpush1.msra.mxu0 0.0
    %109 = vmatprep.subr.mxu0 0.0
    %110 = vmatpush1.msra.mxu0 0.0
    %111 = vmatprep.subr.mxu0 0.0
    %112 = vmatpush1.msra.mxu0 0.0
    %113 = vmatprep.subr.mxu0 0.0
    %114 = vmatpush1.msra.mxu0 0.0
    %115 = vmatprep.subr.mxu0 0.0
    %116 = vmatpush1.msra.mxu0 0.0
    %117 = vmatprep.subr.mxu0 0.0
    %118 = vmatpush1.msra.mxu0 0.0
    %119 = vmatprep.subr.mxu0 0.0
    %120 = vmatpush1.msra.mxu0 0.0
    %121 = vmatprep.subr.mxu0 0.0
    %122 = vmatpush1.msra.mxu0 0.0
    %123 = vmatprep.subr.mxu0 0.0
    %124 = vmatpush1.msra.mxu0 0.0
    %125 = vmatprep.subr.mxu0 0.0
    %126 = vmatpush1.msra.mxu0 0.0
    %127 = vmatprep.subr.mxu0 0.0
    %128 = vmatpush1.msra.mxu0 0.0
    %129 = vmatprep.subr.mxu0 0.0
    %130 = vmatpush1.msra.mxu0 0.0
    %131 = vmatprep.subr.mxu0 0.0
    %132 = vmatpush1.msra.mxu0 0.0
    %133 = vmatprep.subr.mxu0 0.0
    %134 = vmatpush1.msra.mxu0 0.0
    %135 = vmatprep.mubr.f32.mxu0 0.0
    %136 = vmatmul.mubr.f32.gmra.mrb[0].mxu0 %v69
    %v137 = vpop.f32.mrb[0].mxu0
    %v138 = vadd.f32 %v66, %v137
    %v139 = vpop.f32.mrb[0].mxu0
    %140 = vdwg.mxu0
    %v141 = vmax.f32 %v138, 0.0
    %142 = vrot.lane.b32.xlu0 %v63, 120
    %v143 = vpop.permute.xlu0 %142
    %v145 = vmul.f32 %v141, %v143
    %vm146 = vcmask 31744
    %v147 = vsel %vm146, %v145, 0.0
    %148 = vadd.xlane.f32.xlu0 %v147
    %v149 = vpop.xlane.xlu0 %148
    %v150 = vadd.f32 %v149, %v63
    %v151 = vtanh.pop %v150
    %v152 = vmax.f32 %v151, -0.3
    %v153 = vmin.f32 %v152, 0.3
    %155 = vrot.lane.b32.xlu0 %v153, 116
    %v156 = vpop.permute.xlu0 %155
    %vm158 = vcmask 7168
    %159 = vst.msk [vmem:[%s2] sm:$0xff] %vm158, %v156
    // Predicated region
    $region18: #{mlp_gt3_2_forward.1} parent=1 // pred_check
      _
    $region19: #{mlp_gt3_2_forward.1} parent=1 // pred_check_branch
      %161 = sbr.rel (0) target = $region21
    $region20: #{mlp_gt3_2_forward.1} parent=1 // pred_region
      _
    $region21: #{mlp_gt3_2_forward.1} parent=1 // pred_fallthru
      _
    // Predicated region
    $region22: #{mlp_gt3_2_forward.1} parent=1 // pred_check
      _
    $region23: #{mlp_gt3_2_forward.1} parent=1 // pred_check_branch
      %163 = sbr.rel (0) target = $region25
    $region24: #{mlp_gt3_2_forward.1} parent=1 // pred_region
      _
    $region25: #{mlp_gt3_2_forward.1} parent=1 // pred_fallthru
      _
    %164 = vsyncpa [#allocation3], 1
    %165 = vsyncpa [#allocation5], 1

</llo_original>
